<compile_context>
chip_gen: v6e
topology: v6e:2x2x1
jax: 0.10.0
libtpu: 0.0.40
codegen_flags: <defaults>
</compile_context>

<pallas_src>
import functools

import jax
import jax.numpy as jnp
from jax.experimental import pallas as pl
from jax.experimental.pallas import tpu as pltpu

KERNEL_SIZE = 7
PAD = KERNEL_SIZE // 2   # get_padding(7, 1) == 3
EPS = 1e-5               # F.layer_norm default eps
LANE = 128


_ROLL_LIKE_JNP = None


def _roll_like_jnp() -> bool:
    """One-time, cached self-check of pltpu.roll's rotate direction.

    The conv below needs r[:, t] = v[:, (t + off) % TT]; pinning the shift sign
    at runtime means a convention change in pltpu.roll can never silently
    corrupt the depthwise conv.
    """
    global _ROLL_LIKE_JNP
    if _ROLL_LIKE_JNP is None:
        def probe(x_ref, o_ref):
            o_ref[...] = pltpu.roll(x_ref[...], 1, axis=1)

        with jax.ensure_compile_time_eval():
            x = jax.lax.broadcasted_iota(jnp.float32, (8, LANE), 1)
            out = pl.pallas_call(
                probe, out_shape=jax.ShapeDtypeStruct((8, LANE), jnp.float32))(x)
            # jnp.roll semantics => out[0, 0] == x[0, 127] == 127.
            _ROLL_LIKE_JNP = bool(out[0, 0] == float(LANE - 1))
    return _ROLL_LIKE_JNP


def _resblock_kernel(x_ref, halo_ref, w1_ref, b1_ref, gamma_ref, beta_ref,
                     w2_ref, b2_ref, w3_ref, b3_ref, o_ref, *, roll_like_jnp):
    # x_ref   : (1, C, TT)  one (batch, time-tile) block; channels on sublanes,
    #                       time on lanes (NCW-native, no wrapper transpose).
    # halo_ref: (1, 1, C, 2*PAD)  [left | right] conv halo columns of this tile.
    # w1_ref  : (C, K) depthwise taps; b1/gamma/beta/b2/b3: (C, 1).
    # w2/w3   : (C_out, C_in), pre-cast to the MXU operand dtype in the wrapper.
    C = o_ref.shape[1]
    TT = o_ref.shape[2]
    mm_dtype = w2_ref.dtype

    def lane_lookup(v, off):
        # r[:, t] = v[:, (t + off) % TT]  -- XLU lane rotate (free-ish slot).
        shift = ((-off) if roll_like_jnp else off) % TT
        return v if shift == 0 else pltpu.roll(v, shift, axis=1)

    x = x_ref[0].astype(jnp.float32)                        # (C, TT)
    w1 = w1_ref[...].astype(jnp.float32)                    # (C, K)
    pos = jax.lax.broadcasted_iota(jnp.int32, (1, TT), 1)   # lane index

    # ---- depthwise conv1d (k=7, 'same' zero padding, groups=C) -------------
    # Interior taps: lane rotations of the resident tile, zero-masked at the
    # tile edges.  No VMEM halo scratch, no unaligned slices.
    acc = w1[:, PAD:PAD + 1] * x                            # centre tap (d = 0)
    for k in range(KERNEL_SIZE):
        d = k - PAD
        if d == 0:
            continue
        shifted = lane_lookup(x, d)
        if d < 0:
            shifted = jnp.where(pos >= -d, shifted, 0.0)
        else:
            shifted = jnp.where(pos < TT - d, shifted, 0.0)
        acc = acc + w1[:, k:k + 1] * shifted

    # Cross-tile halo: PAD columns from each neighbouring time tile (zeros at
    # the sequence ends).  Only the first/last PAD output lanes are affected,
    # so the correction is tiny (C, 1) math scattered with lane-index selects.
    halo = halo_ref[0, 0].astype(jnp.float32)               # (C, 2*PAD)
    hl, hr = halo[:, :PAD], halo[:, PAD:]
    for e in range(PAD):                                    # e lanes from left edge
        cl = jnp.zeros((C, 1), jnp.float32)
        for j in range(e, PAD):
            cl = cl + hl[:, j:j + 1] * w1[:, j - e:j - e + 1]
        acc = acc + jnp.where(pos == e, cl, 0.0)
    for e in range(PAD):                                    # e lanes from right edge
        cr = jnp.zeros((C, 1), jnp.float32)
        for j in range(PAD - e):
            cr = cr + hr[:, j:j + 1] * w1[:, PAD + 1 + e + j:PAD + 2 + e + j]
        acc = acc + jnp.where(pos == TT - 1 - e, cr, 0.0)
    h = acc + b1_ref[...]                                   # (C, TT)

    # ---- LayerNorm over channels (two-pass; matches F.layer_norm) ----------
    inv_c = 1.0 / C
    mean = jnp.sum(h, axis=0, keepdims=True) * inv_c        # (1, TT)
    cent = h - mean
    var = jnp.sum(cent * cent, axis=0, keepdims=True) * inv_c
    hn = cent * jax.lax.rsqrt(var + EPS) * gamma_ref[...] + beta_ref[...]
    # TODO(synk): if a bundle dump shows the XLU slot binding, move these two
    # channel reductions onto the (mostly idle) MXU via ones(1, C) @ h.

    # ---- pointwise convs c2/c3 on the MXU (pre-cast weights, f32 acc) ------
    y = jnp.dot(w2_ref[...], hn.astype(mm_dtype),
                preferred_element_type=jnp.float32) + b2_ref[...]
    y = jnp.maximum(y, 0.1 * y)                             # leaky_relu(0.1)
    z = jnp.dot(w3_ref[...], y.astype(mm_dtype),
                preferred_element_type=jnp.float32) + b3_ref[...]

    # Residual: re-read the (VMEM-resident) input block instead of keeping the
    # f32 copy of x live across the whole body.
    o_ref[0] = (z + x_ref[0].astype(jnp.float32)).astype(o_ref.dtype)


def _pick_time_tile(t_padded, channels, max_tile):
    """Largest multiple of 128 that divides the lane-aligned time extent,
    capped so one (C, T_TILE) f32 slab stays around <= 1 MiB (v7x-safe)."""
    cap = max(LANE, min(int(max_tile), ((1 << 20) // (4 * channels)) // LANE * LANE))
    best = LANE
    tile = LANE
    while tile <= min(t_padded, cap):
        if t_padded % tile == 0:
            best = tile
        tile += LANE
    return best


def resblock_forward(x, params, *, matmul_dtype=jnp.bfloat16, max_time_tile=2048):
    """x: (B, C, T) float32 (PyTorch NCW).  Returns (B, C, T)."""
    B, C, T = x.shape
    w1, b1, gamma, beta, w2, b2, w3, b3 = params

    # bf16 MXU operands (f32 accumulation) by default; cast once here, not per
    # grid step.  All elementwise / LayerNorm math stays f32 inside the kernel.
    w2m = w2.astype(matmul_dtype)
    w3m = w3.astype(matmul_dtype)

    # Lane-align the time axis so every output store is an unmasked full-width
    # vst and the MXU N dimension is >= 128 wide.
    t_pad = ((T + LANE - 1) // LANE) * LANE
    x_in = x if t_pad == T else jnp.pad(x, ((0, 0), (0, 0), (0, t_pad - T)))
    # TODO(synk): a ragged last tile (pl.BoundedSlice) would avoid the extra
    # pad/crop HBM pass when T is far from a multiple of 128.

    t_tile = _pick_time_tile(t_pad, C, max_time_tile)
    nt = t_pad // t_tile

    # Per-tile conv halo: PAD columns on each side of every time tile (zeros at
    # the sequence ends).  Tiny (B*NT*C*6 elements) and precomputed, so tiles
    # never have to read neighbouring (output-aliased) x blocks.
    tiles = x_in.reshape(B, C, nt, t_tile)
    zeros = jnp.zeros((B, C, 1, PAD), x_in.dtype)
    left = jnp.concatenate([zeros, tiles[:, :, :-1, t_tile - PAD:]], axis=2)
    right = jnp.concatenate([tiles[:, :, 1:, :PAD], zeros], axis=2)
    halos = jnp.concatenate([left, right], axis=3).transpose(0, 2, 1, 3)

    kernel = functools.partial(_resblock_kernel, roll_like_jnp=_roll_like_jnp())

    # Advisory cost estimate (2 pointwise matmuls + depthwise conv + LN/act).
    flops = B * t_pad * (4 * C * C + 2 * KERNEL_SIZE * C + 12 * C)
    bytes_accessed = 4 * (2 * B * C * t_pad + 2 * C * C + C * (KERNEL_SIZE + 5))
    cost = pl.CostEstimate(flops=flops, transcendentals=B * t_pad,
                           bytes_accessed=bytes_accessed)

    out = pl.pallas_call(
        kernel,
        out_shape=jax.ShapeDtypeStruct((B, C, t_pad), x.dtype),
        grid_spec=pltpu.PrefetchScalarGridSpec(
            num_scalar_prefetch=0,
            grid=(B, nt),
            in_specs=[
                pl.BlockSpec((1, C, t_tile), lambda b, t: (b, 0, t)),         # x
                pl.BlockSpec((1, 1, C, 2 * PAD), lambda b, t: (b, t, 0, 0)),  # halos
                pl.BlockSpec((C, KERNEL_SIZE), lambda b, t: (0, 0)),          # w1
                pl.BlockSpec((C, 1), lambda b, t: (0, 0)),                    # b1
                pl.BlockSpec((C, 1), lambda b, t: (0, 0)),                    # gamma
                pl.BlockSpec((C, 1), lambda b, t: (0, 0)),                    # beta
                pl.BlockSpec((C, C), lambda b, t: (0, 0)),                    # w2
                pl.BlockSpec((C, 1), lambda b, t: (0, 0)),                    # b2
                pl.BlockSpec((C, C), lambda b, t: (0, 0)),                    # w3
                pl.BlockSpec((C, 1), lambda b, t: (0, 0)),                    # b3
            ],
            out_specs=pl.BlockSpec((1, C, t_tile), lambda b, t: (b, 0, t)),
        ),
        compiler_params=pltpu.CompilerParams(
            dimension_semantics=("parallel", "parallel"),
            vmem_limit_bytes=48 * 1024 * 1024),
        cost_estimate=cost,
        # Safe: halos are precomputed and every block is fully read before its
        # (aliased) output block is written back.
        input_output_aliases={0: 0},
    )(x_in, halos, w1, b1, gamma, beta, w2m, b2, w3m, b3)

    return out if t_pad == T else out[:, :, :T]


def make_params(key, C):
    """Deterministic synthetic parameters in native PyTorch orientation."""
    ks = jax.random.split(key, 6)
    w1 = jax.random.normal(ks[0], (C, KERNEL_SIZE), jnp.float32) * 0.2
    b1 = jax.random.normal(ks[1], (C, 1), jnp.float32) * 0.1
    gamma = jnp.ones((C, 1), jnp.float32)
    beta = jnp.zeros((C, 1), jnp.float32)
    w2 = jax.random.normal(ks[2], (C, C), jnp.float32) * (1.0 / jnp.sqrt(C))
    b2 = jax.random.normal(ks[3], (C, 1), jnp.float32) * 0.1
    w3 = jax.random.normal(ks[4], (C, C), jnp.float32) * (1.0 / jnp.sqrt(C))
    b3 = jax.random.normal(ks[5], (C, 1), jnp.float32) * 0.1
    return (w1, b1, gamma, beta, w2, b2, w3, b3)


def resblock_reference(x, params):
    """Pure-JAX reference of the PyTorch forward (for correctness checks)."""
    w1, b1, gamma, beta, w2, b2, w3, b3 = params
    B, C, T = x.shape
    xp = jnp.pad(x, ((0, 0), (0, 0), (PAD, PAD)))
    h = sum(xp[:, :, k:k + T] * w1[:, k][None, :, None]
            for k in range(KERNEL_SIZE))
    h = h + b1[None]
    mean = h.mean(axis=1, keepdims=True)
    var = ((h - mean) ** 2).mean(axis=1, keepdims=True)
    hn = (h - mean) / jnp.sqrt(var + EPS) * gamma[None] + beta[None]
    y = jnp.einsum('oc,bct->bot', w2, hn, precision="highest") + b2[None]
    y = jnp.where(y > 0, y, 0.1 * y)
    z = jnp.einsum('oc,bct->bot', w3, y, precision="highest") + b3[None]
    return z + x


if __name__ == "__main__":
    key = jax.random.PRNGKey(0)
    kx, kp, kx2 = jax.random.split(key, 3)

    B, C, T = 2, 32, 256
    x = jax.random.normal(kx, (B, C, T), jnp.float32)
    params = make_params(kp, C)
    ref = resblock_reference(x, params)

    # Multi-tile path: two 128-lane time tiles per batch element (exercises the
    # cross-tile conv halo), default bf16 MXU operands with f32 accumulation.
    out = jax.block_until_ready(resblock_forward(x, params, max_time_tile=128))
    assert out.shape == (B, C, T)
    assert float(jnp.max(jnp.abs(out - ref))) < 0.15, "bf16 multi-tile mismatch"

    # Same tiling, f32 MXU operands: tight check against the pure-JAX reference.
    out_f32 = jax.block_until_ready(
        resblock_forward(x, params, matmul_dtype=jnp.float32, max_time_tile=128))
    assert jnp.allclose(out_f32, ref, atol=1e-3, rtol=1e-3), "f32 mismatch"

    # Short-sequence path (T=64 < 128): wrapper lane-pads to 128, single tile.
    T2 = 64
    x2 = jax.random.normal(kx2, (B, C, T2), jnp.float32)
    ref2 = resblock_reference(x2, params)
    out2 = jax.block_until_ready(
        resblock_forward(x2, params, matmul_dtype=jnp.float32))
    assert out2.shape == (B, C, T2)
    assert jnp.allclose(out2, ref2, atol=1e-3, rtol=1e-3), "short-T mismatch"

    print("KERNEL_OK")
</pallas_src>

<mosaic_0001>
module attributes {stable_mosaic.version = 11 : i64} {
  func.func @probe(%arg0: memref<8x128xf32, #tpu.memory_space<vmem>>, %arg1: memref<8x128xf32, #tpu.memory_space<vmem>>) attributes {dimension_semantics = [], scalar_prefetch = 0 : i64, scratch_operands = 0 : i64, tpu.core_type = #tpu.core_type<tc>} {
    %c0 = arith.constant 0 : index
    %c0_0 = arith.constant 0 : index
    %0 = vector.load %arg0[%c0, %c0_0] : memref<8x128xf32, #tpu.memory_space<vmem>>, vector<8x128xf32>
    %c1_i32 = arith.constant 1 : i32
    %1 = tpu.dynamic_rotate %0 by %c1_i32 dim 1 : vector<8x128xf32>, i32 -> vector<8x128xf32>
    %c0_1 = arith.constant 0 : index
    %c0_2 = arith.constant 0 : index
    %2 = vector.load %arg1[%c0_1, %c0_2] : memref<8x128xf32, #tpu.memory_space<vmem>>, vector<8x128xf32>
    tpu.vector_store %arg1[%c0_1, %c0_2], %1 {strides = array<i32>} : memref<8x128xf32, #tpu.memory_space<vmem>>, vector<8x128xf32>,
    return
  }
}

</mosaic_0001>

<llo_original>
// kernel: tpu_custom_call.1
$region0: #{tpu_custom_call.1}
  #allocation0 [shape = 'u32[]', space=smem, size = 0x4, offset = 0x4, fixed_abs, tag = 'smem constant byte address 0x4 - core index']
  #allocation1 [shape = 'u32[144,128]{1,0:T(1,128)}', space=vmem, size = 0x12000, scoped, tag = 'internal scratch']
  %s0 = inlined_call_operand.hbm [shape: f32[8,128], index: 0, kind: input, shape index: {}]
  %s1 = inlined_call_operand.hbm [shape: f32[8,128], index: 1, kind: output, shape index: {}]
  %s2 = sld [smem:[#allocation0]]
  $region18: #{tpu_custom_call.1} parent=0
    _
  %s4 = ssub.s32 1, %s2
  %s5 = scalar_select 0, %s4, %s2
  $region1: #{tpu_custom_call.1} parent=0
    #allocation2 [shape = 'u8[4096]{0}', space=vmem, size = 0x1000, scoped, tag = 'input window, operand 0, single buffered']
    #allocation3 [shape = 's32[1]{0}', space=sflag, size = 0x4, scoped, tag = 'scoped memory for tpu_custom_call.1']
    #allocation4 [shape = 's32[1]{0}', space=sflag, size = 0x4, scoped, tag = 'scoped memory for tpu_custom_call.1']
    #allocation5 [shape = 'u8[4096]{0}', space=vmem, size = 0x1000, scoped, tag = 'output window, operand 0, single buffered']
    %6 = vsyncpa [#allocation3], 0
    %7 = vsyncpa [#allocation4], 0
    // Predicated region
    $region2: #{tpu_custom_call.1} parent=1 // pred_check
      _
    $region3: #{tpu_custom_call.1} parent=1 // pred_check_branch
      %9 = sbr.rel (0) target = $region5
    $region4: #{tpu_custom_call.1} parent=1 // pred_region
      %s11 = ssub.s32 128, 128
      %12 = vsyncadd [#allocation3], %s11
      %s14 = sshll.u32 [#allocation2], 4
      %s15 = int_to_ptr.vmem [resolvable:$true] %s14
      %17 = dma.hbm_to_vmem [thread:$0]  %s0, 128, %s15, [#allocation3]
    $region5: #{tpu_custom_call.1} parent=1 // pred_fallthru
      _
    // Predicated region
    $region6: #{tpu_custom_call.1} parent=1 // pred_check
      _
    $region7: #{tpu_custom_call.1} parent=1 // pred_check_branch
      %19 = sbr.rel (0) target = $region9
    $region8: #{tpu_custom_call.1} parent=1 // pred_region
      %20 = dma.done [#allocation3], 128
    $region9: #{tpu_custom_call.1} parent=1 // pred_fallthru
      _
    %v21 = vld [vmem:[#allocation2] sm:$0xff]
    %22 = vrot.lane.b32.xlu0 %v21, 1
    %v23 = vpop.permute.xlu0 %22
    %24 = vst [vmem:[#allocation5] sm:$0xff] %v23
    // Predicated region
    $region10: #{tpu_custom_call.1} parent=1 // pred_check
      _
    $region11: #{tpu_custom_call.1} parent=1 // pred_check_branch
      %26 = sbr.rel (0) target = $region13
    $region12: #{tpu_custom_call.1} parent=1 // pred_region
      %s28 = ssub.s32 128, 128
      %29 = vsyncadd [#allocation4], %s28
      %s31 = sshll.u32 [#allocation5], 4
      %s32 = int_to_ptr.vmem [resolvable:$true] %s31
      %34 = dma.vmem_to_hbm [thread:$0]  %s32, 128, %s1, [#allocation4]
    $region13: #{tpu_custom_call.1} parent=1 // pred_fallthru
      _
    // Predicated region
    $region14: #{tpu_custom_call.1} parent=1 // pred_check
      _
    $region15: #{tpu_custom_call.1} parent=1 // pred_check_branch
      %36 = sbr.rel (0) target = $region17
    $region16: #{tpu_custom_call.1} parent=1 // pred_region
      %37 = dma.done [#allocation4], 128
    $region17: #{tpu_custom_call.1} parent=1 // pred_fallthru
      _
    %38 = vsyncpa [#allocation3], 1
    %39 = vsyncpa [#allocation4], 1

</llo_original>
